<compile_context>
chip_gen: v7x
topology: tpu7x:2x2x1
jax: 0.10.0
libtpu: 0.0.40
codegen_flags: <defaults>
</compile_context>

<pallas_src>
import functools

import jax
import jax.numpy as jnp
from jax.experimental import pallas as pl
from jax.experimental.pallas import tpu as pltpu


def _round_up(x, m):
    return ((x + m - 1) // m) * m


def _conv3d_lrelu_kernel(x_ref, m_ref, b_ref, o_ref, *, d_tile, height, alpha):
    """One (batch, depth-tile) step.
    x_ref: (Dp, Hp, K_tap)      padded volume of this batch element (bf16).
    m_ref: (9*K_tap, N)         stacked banded weight matrix (bf16).
    b_ref: (1, N)               bias tiled along W (f32).
    o_ref: (d_tile*H, N)        lane-dense output rows for this depth tile."""
    k_tap = x_ref.shape[-1]
    rows = d_tile * height
    d0 = pl.program_id(1) * d_tile

    # Depth window (halo of 2) for this tile: leading-dim dynamic slice (cheap).
    xwin = x_ref[pl.ds(d0, d_tile + 2), :, :]                  # (d_tile+2, Hp, K)

    # Only 3 sublane-shifted windows (one per kh); the kd shifts are free
    # leading-dim slices of these values.
    shifted = [xwin[:, kh:kh + height, :] for kh in range(3)]  # (d_tile+2, H, K)

    # In-register im2col: 9 pieces, each a whole multiple of 128 lanes, so the
    # concat is aligned and feeds a single K = 9*K_tap MXU matmul.
    pieces = []
    for kd in range(3):                                        # tap = kd*3 + kh
        for kh in range(3):
            pieces.append(shifted[kh][kd:kd + d_tile, :, :].reshape(rows, k_tap))
    slab = jnp.concatenate(pieces, axis=-1)                    # (rows, 9*K) bf16

    acc = jnp.dot(slab, m_ref[...], preferred_element_type=jnp.float32)
    acc = acc + b_ref[...]                                     # f32 epilogue
    acc = jnp.where(acc >= 0.0, acc, alpha * acc)              # LeakyReLU(alpha)
    o_ref[...] = acc.astype(o_ref.dtype)


def prepare_conv_block_params(weight, bias, width):
    """Fold the kw taps, the channel mixing and the 'same' padding in W of a
    PyTorch (Cout, Cin, 3, 3, 3) Conv3d weight into a stacked banded matrix
        M[(kd*3+kh)*K + w'*Cin + ci, w*Cout + co] = weight[co, ci, kd, kh, w'-w+1]
    (zero when |w'-w| > 1; zero rows for the lane padding w'*Cin+ci >= W*Cin).
    Depends only on the conv parameters -> compute once per weight update and
    reuse across forwards.  Returns (m_all[9*K, W*Cout] bf16, b_row[1, W*Cout] f32)."""
    cout, cin = weight.shape[0], weight.shape[1]
    w = width
    k_tap = _round_up(w * cin, 128)

    kw = jnp.arange(w)[:, None] - jnp.arange(w)[None, :] + 1        # kw[w', w]
    valid = (kw >= 0) & (kw <= 2)
    wsel = weight[:, :, :, :, jnp.clip(kw, 0, 2)]                   # (Co,Ci,3,3,W,W)
    wsel = jnp.where(valid[None, None, None, None], wsel, 0.0)
    m = jnp.transpose(wsel, (2, 3, 4, 1, 5, 0))                     # (kd,kh,w',ci,w,co)
    m = m.reshape(9, w * cin, w * cout)
    m = jnp.pad(m, ((0, 0), (0, k_tap - w * cin), (0, 0)))
    m_all = m.reshape(9 * k_tap, w * cout).astype(jnp.bfloat16)

    b_row = jnp.tile(bias, w).reshape(1, w * cout).astype(jnp.float32)
    return m_all, b_row


def conv_block_apply(x, m_all, b_row, alpha=0.1):
    """Fused Conv3d(3x3x3, stride 1, padding 1) + LeakyReLU(alpha).
    x: (B, Cin, D, H, W) NCDHW (PyTorch layout); returns NCDHW."""
    B, Cin, D, H, W = x.shape
    N = b_row.shape[-1]
    Cout = N // W
    k_tap = m_all.shape[0] // 9
    Dp, Hp = D + 2, H + 2
    # >= 4 depth tiles per batch element so each v7x TensorCore gets pipeline depth.
    d_tile = next(t for t in (4, 2, 1) if D % t == 0)

    # Single fused layout pass: channels-last, zero-pad D/H by 1 (W padding is
    # folded into m_all), merge (w, ci) into the lane dim, zero-pad the lane dim
    # to a multiple of 128, cast to bf16 for the MXU.
    xcl = jnp.transpose(x, (0, 2, 3, 4, 1)).reshape(B, D, H, W * Cin)
    x_rows = jnp.pad(xcl, ((0, 0), (1, 1), (1, 1), (0, k_tap - W * Cin)))
    x_rows = x_rows.astype(jnp.bfloat16)

    kernel = functools.partial(_conv3d_lrelu_kernel,
                               d_tile=d_tile, height=H, alpha=alpha)
    # Per-step VMEM: x block Dp*Hp*k_tap*2B + weights 9*k_tap*N*2B + out tile
    # d_tile*H*N*4B  -- well under the default scoped limit on v5e/v6e/v7x at
    # these sizes.  m_all / b_row have constant index_maps so they are DMA'd
    # once and not re-fetched per step (pipeline_mode=pl.Buffered(1) would also
    # single-buffer them if VMEM ever gets tight).
    out = pl.pallas_call(
        kernel,
        out_shape=jax.ShapeDtypeStruct((B, D * H, N), x.dtype),
        grid=(B, D // d_tile),
        in_specs=[
            pl.BlockSpec((None, Dp, Hp, k_tap), lambda b, j: (b, 0, 0, 0)),
            pl.BlockSpec((9 * k_tap, N), lambda b, j: (0, 0)),
            pl.BlockSpec((1, N), lambda b, j: (0, 0)),
        ],
        out_specs=pl.BlockSpec((None, d_tile * H, N), lambda b, j: (b, j, 0)),
        compiler_params=pltpu.CompilerParams(
            dimension_semantics=("parallel", "parallel")),
    )(x_rows, m_all, b_row)

    out = out.reshape(B, D, H, W, Cout)
    # TODO(synk): NDHWC consumers should take `out` directly; the transpose below
    # exists only to reproduce the PyTorch module's NCDHW interface.
    return jnp.transpose(out, (0, 4, 1, 2, 3))


def conv_block_forward(x, weight, bias, alpha=0.1):
    """PyTorch-parity entry point: ConvBlock.forward(x) = LeakyReLU(Conv3d(x)).
    In a model, hoist prepare_conv_block_params() out of the per-step path."""
    m_all, b_row = prepare_conv_block_params(weight, bias, x.shape[-1])
    return conv_block_apply(x, m_all, b_row, alpha=alpha)


if __name__ == "__main__":
    key = jax.random.PRNGKey(0)
    kx, kw_, kb = jax.random.split(key, 3)

    B, Cin, Cout = 2, 4, 8
    D = H = W = 16                        # W * Cout = 128 -> lane-dense output

    x = jax.random.normal(kx, (B, Cin, D, H, W), dtype=jnp.float32)
    bound = (Cin * 27) ** -0.5            # PyTorch Conv3d default init scale
    weight = jax.random.uniform(kw_, (Cout, Cin, 3, 3, 3), jnp.float32,
                                -bound, bound)
    bias = jax.random.uniform(kb, (Cout,), jnp.float32, -bound, bound)

    # Weight-dependent prep is hoisted out of the per-forward path (review item:
    # compute once per weight update, reuse across forwards).
    m_all, b_row = prepare_conv_block_params(weight, bias, W)
    forward = jax.jit(conv_block_apply)   # alpha defaults to 0.1 (module default)

    out = forward(x, m_all, b_row)
    jax.block_until_ready(out)
    assert out.shape == (B, Cout, D, H, W) and out.dtype == jnp.float32

    # reference: XLA fp32 conv + bias + LeakyReLU
    ref = jax.lax.conv_general_dilated(
        x, weight, window_strides=(1, 1, 1),
        padding=((1, 1), (1, 1), (1, 1)),
        dimension_numbers=("NCDHW", "OIDHW", "NCDHW"),
        precision=jax.lax.Precision.HIGHEST)
    ref = ref + bias.reshape(1, Cout, 1, 1, 1)
    ref = jnp.where(ref >= 0.0, ref, 0.1 * ref)
    # bf16 operands with f32 accumulation -> ~1e-3 rms / <1e-2 max expected.
    err = float(jnp.max(jnp.abs(out - ref)))
    assert err < 2e-2, f"max abs error vs reference: {err}"
    print("KERNEL_OK")
</pallas_src>

<mosaic_0001>
module attributes {stable_mosaic.version = 11 : i64} {
  func.func @_conv3d_lrelu_kernel(%arg0: i32, %arg1: i32, %arg2: memref<1x18x18x128xbf16, #tpu.memory_space<vmem>>, %arg3: memref<1152x128xbf16, #tpu.memory_space<vmem>>, %arg4: memref<1x128xf32, #tpu.memory_space<vmem>>, %arg5: memref<1x64x128xf32, #tpu.memory_space<vmem>>) attributes {dimension_semantics = [#tpu.dimension_semantics<parallel>, #tpu.dimension_semantics<parallel>], iteration_bounds = array<i64: 2, 4>, scalar_prefetch = 0 : i64, scratch_operands = 0 : i64, tpu.core_type = #tpu.core_type<tc>, window_params = [{transform_indices = @transform_0, window_bounds = array<i64: 1, 18, 18, 128>}, {pipeline_mode = #tpu.pipeline_mode<synchronous>, transform_indices = @transform_1, window_bounds = array<i64: 1152, 128>}, {pipeline_mode = #tpu.pipeline_mode<synchronous>, transform_indices = @transform_2, window_bounds = array<i64: 1, 128>}, {transform_indices = @transform_3, window_bounds = array<i64: 1, 64, 128>}]} {
    %c4_i32 = arith.constant 4 : i32
    %0 = arith.muli %arg1, %c4_i32 : i32
    %c0 = arith.constant 0 : index
    %1 = arith.index_cast %0 : i32 to index
    %c0_0 = arith.constant 0 : index
    %c0_1 = arith.constant 0 : index
    %2 = vector.load %arg2[%c0, %1, %c0_0, %c0_1] : memref<1x18x18x128xbf16, #tpu.memory_space<vmem>>, vector<1x6x18x128xbf16>
    %3 = vector.shape_cast %2 : vector<1x6x18x128xbf16> to vector<6x18x128xbf16>
    %4 = vector.extract_strided_slice %3 {offsets = [0, 0, 0], sizes = [6, 16, 128], strides = [1, 1, 1]} : vector<6x18x128xbf16> to vector<6x16x128xbf16>
    %5 = vector.extract_strided_slice %3 {offsets = [0, 1, 0], sizes = [6, 16, 128], strides = [1, 1, 1]} : vector<6x18x128xbf16> to vector<6x16x128xbf16>
    %6 = vector.extract_strided_slice %3 {offsets = [0, 2, 0], sizes = [6, 16, 128], strides = [1, 1, 1]} : vector<6x18x128xbf16> to vector<6x16x128xbf16>
    %7 = vector.extract_strided_slice %4 {offsets = [0, 0, 0], sizes = [4, 16, 128], strides = [1, 1, 1]} : vector<6x16x128xbf16> to vector<4x16x128xbf16>
    %8 = vector.shape_cast %7 : vector<4x16x128xbf16> to vector<64x128xbf16>
    %9 = vector.extract_strided_slice %5 {offsets = [0, 0, 0], sizes = [4, 16, 128], strides = [1, 1, 1]} : vector<6x16x128xbf16> to vector<4x16x128xbf16>
    %10 = vector.shape_cast %9 : vector<4x16x128xbf16> to vector<64x128xbf16>
    %11 = vector.extract_strided_slice %6 {offsets = [0, 0, 0], sizes = [4, 16, 128], strides = [1, 1, 1]} : vector<6x16x128xbf16> to vector<4x16x128xbf16>
    %12 = vector.shape_cast %11 : vector<4x16x128xbf16> to vector<64x128xbf16>
    %13 = vector.extract_strided_slice %4 {offsets = [1, 0, 0], sizes = [4, 16, 128], strides = [1, 1, 1]} : vector<6x16x128xbf16> to vector<4x16x128xbf16>
    %14 = vector.shape_cast %13 : vector<4x16x128xbf16> to vector<64x128xbf16>
    %15 = vector.extract_strided_slice %5 {offsets = [1, 0, 0], sizes = [4, 16, 128], strides = [1, 1, 1]} : vector<6x16x128xbf16> to vector<4x16x128xbf16>
    %16 = vector.shape_cast %15 : vector<4x16x128xbf16> to vector<64x128xbf16>
    %17 = vector.extract_strided_slice %6 {offsets = [1, 0, 0], sizes = [4, 16, 128], strides = [1, 1, 1]} : vector<6x16x128xbf16> to vector<4x16x128xbf16>
    %18 = vector.shape_cast %17 : vector<4x16x128xbf16> to vector<64x128xbf16>
    %19 = vector.extract_strided_slice %4 {offsets = [2, 0, 0], sizes = [4, 16, 128], strides = [1, 1, 1]} : vector<6x16x128xbf16> to vector<4x16x128xbf16>
    %20 = vector.shape_cast %19 : vector<4x16x128xbf16> to vector<64x128xbf16>
    %21 = vector.extract_strided_slice %5 {offsets = [2, 0, 0], sizes = [4, 16, 128], strides = [1, 1, 1]} : vector<6x16x128xbf16> to vector<4x16x128xbf16>
    %22 = vector.shape_cast %21 : vector<4x16x128xbf16> to vector<64x128xbf16>
    %23 = vector.extract_strided_slice %6 {offsets = [2, 0, 0], sizes = [4, 16, 128], strides = [1, 1, 1]} : vector<6x16x128xbf16> to vector<4x16x128xbf16>
    %24 = vector.shape_cast %23 : vector<4x16x128xbf16> to vector<64x128xbf16>
    %25 = tpu.concatenate %8, %10, %12, %14, %16, %18, %20, %22, %24 in 1 : vector<64x128xbf16>, vector<64x128xbf16>, vector<64x128xbf16>, vector<64x128xbf16>, vector<64x128xbf16>, vector<64x128xbf16>, vector<64x128xbf16>, vector<64x128xbf16>, vector<64x128xbf16> -> vector<64x1152xbf16>
    %c0_2 = arith.constant 0 : index
    %c0_3 = arith.constant 0 : index
    %26 = vector.load %arg3[%c0_2, %c0_3] : memref<1152x128xbf16, #tpu.memory_space<vmem>>, vector<1152x128xbf16>
    %cst = arith.constant dense<0.000000e+00> : vector<64x128xf32>
    %27 = tpu.matmul %25, %26, %cst {dimension_numbers = #tpu.dot_dimension_numbers<[1], [0], [0], [1], [0, 0, 1, 1], [], []>} : vector<64x1152xbf16>, vector<1152x128xbf16>, vector<64x128xf32> -> vector<64x128xf32>
    %c0_4 = arith.constant 0 : index
    %c0_5 = arith.constant 0 : index
    %28 = vector.load %arg4[%c0_4, %c0_5] : memref<1x128xf32, #tpu.memory_space<vmem>>, vector<1x128xf32>
    %29 = vector.broadcast %28 : vector<1x128xf32> to vector<64x128xf32>
    %30 = arith.addf %27, %29 : vector<64x128xf32>
    %cst_6 = arith.constant 0.000000e+00 : f32
    %31 = vector.broadcast %cst_6 : f32 to vector<64x128xf32>
    %32 = arith.cmpf oge, %30, %31 : vector<64x128xf32>
    %cst_7 = arith.constant 1.000000e-01 : f32
    %33 = vector.broadcast %cst_7 : f32 to vector<64x128xf32>
    %34 = arith.mulf %33, %30 : vector<64x128xf32>
    %35 = arith.select %32, %30, %34 : vector<64x128xi1>, vector<64x128xf32>
    %c0_8 = arith.constant 0 : index
    %c0_9 = arith.constant 0 : index
    %c0_10 = arith.constant 0 : index
    %36 = vector.load %arg5[%c0_8, %c0_9, %c0_10] : memref<1x64x128xf32, #tpu.memory_space<vmem>>, vector<1x64x128xf32>
    %37 = vector.shape_cast %36 : vector<1x64x128xf32> to vector<64x128xf32>
    %38 = vector.shape_cast %35 : vector<64x128xf32> to vector<1x64x128xf32>
    tpu.vector_store %arg5[%c0_8, %c0_9, %c0_10], %38 {strides = array<i32>} : memref<1x64x128xf32, #tpu.memory_space<vmem>>, vector<1x64x128xf32>,
    return
  }
  func.func @transform_0(%arg0: i32, %arg1: i32) -> (i32, i32, i32, i32) {
    %c0_i32 = arith.constant 0 : i32
    %c0_i32_0 = arith.constant 0 : i32
    %c0_i32_1 = arith.constant 0 : i32
    %c0_i32_2 = arith.constant 0 : i32
    return %arg0, %c0_i32, %c0_i32_0, %c0_i32_1 : i32, i32, i32, i32
  }
  func.func @transform_1(%arg0: i32, %arg1: i32) -> (i32, i32) {
    %c0_i32 = arith.constant 0 : i32
    %c0_i32_0 = arith.constant 0 : i32
    %c0_i32_1 = arith.constant 0 : i32
    return %c0_i32, %c0_i32_0 : i32, i32
  }
  func.func @transform_2(%arg0: i32, %arg1: i32) -> (i32, i32) {
    %c0_i32 = arith.constant 0 : i32
    %c0_i32_0 = arith.constant 0 : i32
    %c0_i32_1 = arith.constant 0 : i32
    return %c0_i32, %c0_i32_0 : i32, i32
  }
  func.func @transform_3(%arg0: i32, %arg1: i32) -> (i32, i32, i32) {
    %c0_i32 = arith.constant 0 : i32
    %c0_i32_0 = arith.constant 0 : i32
    return %arg0, %arg1, %c0_i32 : i32, i32, i32
  }
}

</mosaic_0001>

<llo_original>
// kernel: conv_block_apply.1
$region0: #{conv_block_apply.1}
  #allocation0 [shape = 'u32[]', space=smem, size = 0x4, offset = 0x4, fixed_abs, tag = 'smem constant byte address 0x4 - core index']
  #allocation1 [shape = 'u32[144,128]{1,0:T(1,128)}', space=vmem, size = 0x12000, scoped, tag = 'internal scratch']
  %s0 = inlined_call_operand.vmem [shape: bf16[2,18,18,128], index: 0, kind: input, shape index: {}]
  %s1 = inlined_call_operand.vmem [shape: bf16[1152,128], index: 1, kind: input, shape index: {}]
  %s2 = inlined_call_operand.vmem [shape: f32[1,128], index: 2, kind: input, shape index: {}]
  %s3 = inlined_call_operand.vmem [shape: f32[2,256,128], index: 3, kind: output, shape index: {}]
  %s4 = sld [smem:[#allocation0]]
  $region45: #{conv_block_apply.1} parent=0
    _
  %s6 = ssub.s32 1, %s4
  %s7 = scalar_select 0, %s6, %s4
  loop: start=0, step=1, limit=10
  $region2: #{conv_block_apply.1} parent=0 // loop_pre_header
    _
  $region3: #{conv_block_apply.1} parent=0 // loop_header
    %s9 = sphi 0, %s13
    %p10 = scmp.ge.s32.totalorder %s9, 10
    %s16 = sphi 0, %s28
    %s17 = sphi 0, %s24
    %s18 = sphi 0, %s16
    %s19 = sphi 0, %s17
    %s20 = sphi 0, %s18
    %s21 = sphi 0, %s19
    %s31 = sphi 0, %s33
    %s34 = sphi 0, %s31
    %s35 = sphi 0, %s34
    %s51 = sphi 0, %s35
    %s55 = sphi 0, %s55
    %s57 = sphi 0, %s55
    %s58 = sphi 0, %s57
    %s72 = sphi 0, %s58
    %s76 = sphi 0, %s76
    %s78 = sphi 0, %s76
    %s79 = sphi 0, %s78
    %s93 = sphi 0, %s79
    %s101 = sphi 0, %s103
    %s104 = sphi 0, %s101
    %s105 = sphi 0, %s104
    %s121 = sphi 0, %s105
  $region4: #{conv_block_apply.1} parent=0 // loop_header_branch
    %12 = sbr.rel (%p10) target = $region8
  $region5: #{conv_block_apply.1} parent=0 // loop_body
    %s14 = ssub.s32 %s9, 1
    %s15 = ssub.s32 %s9, 2
    %s22 = sadd.s32 1, %s17
    %p23 = scmp.ge.s32.totalorder %s22, 4
    %s24 = scalar_select %p23, 0, %s22
    %s25 = sadd.s32 1, %s16
    %s26 = scalar_select %p23, %s25, %s16
    %p27 = scmp.ge.s32.totalorder %s26, 2
    %s28 = scalar_select %p27, 0, %s26
    %s29 = ssub.s32 %s16, %s28
    %p30 = scmp.eq.s32.totalorder %s29, 0
    %s32 = sadd.s32 %s31, 1
    %s33 = scalar_select %p30, %s31, %s32
    %p36 = pneg %p30
    %p37 = scmp.eq.s32.totalorder %s9, 7
    %p38 = por %p36, %p37
    %p39 = scmp.ne.s32.totalorder %s31, %s34
    %p40 = scmp.eq.s32.totalorder %s9, 0
    %p41 = por %p39, %p40
    %p42 = scmp.ne.s32.totalorder %s31, %s34
    %p43 = scmp.eq.s32.totalorder %s14, 7
    %p44 = por %p42, %p43
    %p45 = scmp.ne.s32.totalorder %s34, %s35
    %p46 = scmp.eq.s32.totalorder %s14, 0
    %p47 = por %p45, %p46
    %p48 = scmp.ne.s32.totalorder %s34, %s35
    %p49 = scmp.eq.s32.totalorder %s15, 7
    %p50 = por %p48, %p49
    %p52 = scmp.ne.s32.totalorder %s35, %s51
    %p53 = scmp.eq.s32.totalorder %s15, 0
    %p54 = por %p52, %p53
    %s56 = sadd.s32 %s55, 1
    %p59 = scmp.eq.s32.totalorder %s9, 7
    %p60 = scmp.ne.s32.totalorder %s55, %s57
    %p61 = scmp.eq.s32.totalorder %s9, 0
    %p62 = por %p60, %p61
    %p63 = scmp.ne.s32.totalorder %s55, %s57
    %p64 = scmp.eq.s32.totalorder %s14, 7
    %p65 = por %p63, %p64
    %p66 = scmp.ne.s32.totalorder %s57, %s58
    %p67 = scmp.eq.s32.totalorder %s14, 0
    %p68 = por %p66, %p67
    %p69 = scmp.ne.s32.totalorder %s57, %s58
    %p70 = scmp.eq.s32.totalorder %s15, 7
    %p71 = por %p69, %p70
    %p73 = scmp.ne.s32.totalorder %s58, %s72
    %p74 = scmp.eq.s32.totalorder %s15, 0
    %p75 = por %p73, %p74
    %s77 = sadd.s32 %s76, 1
    %p80 = scmp.eq.s32.totalorder %s9, 7
    %p81 = scmp.ne.s32.totalorder %s76, %s78
    %p82 = scmp.eq.s32.totalorder %s9, 0
    %p83 = por %p81, %p82
    %p84 = scmp.ne.s32.totalorder %s76, %s78
    %p85 = scmp.eq.s32.totalorder %s14, 7
    %p86 = por %p84, %p85
    %p87 = scmp.ne.s32.totalorder %s78, %s79
    %p88 = scmp.eq.s32.totalorder %s14, 0
    %p89 = por %p87, %p88
    %p90 = scmp.ne.s32.totalorder %s78, %s79
    %p91 = scmp.eq.s32.totalorder %s15, 7
    %p92 = por %p90, %p91
    %p94 = scmp.ne.s32.totalorder %s79, %s93
    %p95 = scmp.eq.s32.totalorder %s15, 0
    %p96 = por %p94, %p95
    %s97 = ssub.s32 %s16, %s28
    %s98 = ssub.s32 %s17, %s24
    %s99 = sor.u32 %s97, %s98
    %p100 = scmp.eq.s32.totalorder %s99, 0
    %s102 = sadd.s32 %s101, 1
    %s103 = scalar_select %p100, %s101, %s102
    %p106 = pneg %p100
    %p107 = scmp.eq.s32.totalorder %s9, 7
    %p108 = por %p106, %p107
    %p109 = scmp.ne.s32.totalorder %s101, %s104
    %p110 = scmp.eq.s32.totalorder %s9, 0
    %p111 = por %p109, %p110
    %p112 = scmp.ne.s32.totalorder %s101, %s104
    %p113 = scmp.eq.s32.totalorder %s14, 7
    %p114 = por %p112, %p113
    %p115 = scmp.ne.s32.totalorder %s104, %s105
    %p116 = scmp.eq.s32.totalorder %s14, 0
    %p117 = por %p115, %p116
    %p118 = scmp.ne.s32.totalorder %s104, %s105
    %p119 = scmp.eq.s32.totalorder %s15, 7
    %p120 = por %p118, %p119
    %p122 = scmp.ne.s32.totalorder %s105, %s121
    %p123 = scmp.eq.s32.totalorder %s15, 0
    %p124 = por %p122, %p123
    %p125 = scmp.le.s32.totalorder 1, %s9
    %p126 = scmp.lt.s32.totalorder %s9, 9
    %p127 = pnand %p125, %p126
    %p128 = pneg %p127
    // Predicated region
    $region9: #{conv_block_apply.1} parent=5 // pred_check
      _
    $region10: #{conv_block_apply.1} parent=5 // pred_check_branch
      %130 = sbr.rel (%p127) target = $region12
    $region11: #{conv_block_apply.1} parent=5 // pred_region
      %s131 = ssub.s32 %s9, 1
      // Predicated region
      $region13: #{conv_block_apply.1} parent=11 // pred_check
        %p132 = pneg %p68
      $region14: #{conv_block_apply.1} parent=11 // pred_check_branch
        %134 = sbr.rel (%p132) target = $region16
      $region15: #{conv_block_apply.1} parent=11 // pred_region
        _
      $region16: #{conv_block_apply.1} parent=11 // pred_fallthru
        _
      // Predicated region
      $region17: #{conv_block_apply.1} parent=11 // pred_check
        %p135 = pneg %p89
      $region18: #{conv_block_apply.1} parent=11 // pred_check_branch
        %137 = sbr.rel (%p135) target = $region20
      $region19: #{conv_block_apply.1} parent=11 // pred_region
        _
      $region20: #{conv_block_apply.1} parent=11 // pred_fallthru
        _
    $region12: #{conv_block_apply.1} parent=5 // pred_fallthru
      _
    %p138 = scmp.lt.s32.totalorder %s9, 8
    // Predicated region
    $region21: #{conv_block_apply.1} parent=5 // pred_check
      %p139 = pneg %p138
    $region22: #{conv_block_apply.1} parent=5 // pred_check_branch
      %141 = sbr.rel (%p139) target = $region24
    $region23: #{conv_block_apply.1} parent=5 // pred_region
      // Predicated region
      $region25: #{conv_block_apply.1} parent=23 // pred_check
        %p142 = pneg %p41
      $region26: #{conv_block_apply.1} parent=23 // pred_check_branch
        %144 = sbr.rel (%p142) target = $region28
      $region27: #{conv_block_apply.1} parent=23 // pred_region
        %p145 = scmp.lt.s32.totalorder %s16, 1
        %s146 = scalar_select %p145, %s16, 1
        %s147 = smul.addr %s146, 54
        %s148 = smul.addr %s147, 4
        %s149 = scalar_lea.vmem %s0, %s148
      $region28: #{conv_block_apply.1} parent=23 // pred_fallthru
        _
    $region24: #{conv_block_apply.1} parent=5 // pred_fallthru
      _
    %p150 = scmp.le.s32.totalorder 1, %s9
    %p151 = scmp.lt.s32.totalorder %s9, 9
    %p152 = pnand %p150, %p151
    %p153 = pneg %p152
    // Predicated region
    $region29: #{conv_block_apply.1} parent=5 // pred_check
      _
    $region30: #{conv_block_apply.1} parent=5 // pred_check_branch
      %155 = sbr.rel (%p152) target = $region32
    $region31: #{conv_block_apply.1} parent=5 // pred_region
      %s156 = ssub.s32 %s9, 1
      %p157 = scmp.lt.s32.totalorder %s18, 1
      %s158 = scalar_select %p157, %s18, 1
      %s159 = smul.addr %s158, 54
      %s160 = smul.addr %s159, 4
      %s161 = scalar_lea.vmem %s0, %s160
      %p162 = pneg %p47
      %p163 = pneg %p44
      %p164 = pneg %p68
      %p165 = pneg %p65
      %p166 = pneg %p89
      %p167 = pneg %p86
      %p168 = pneg %p117
      %p169 = pneg %p114
      %s170 = smul.u32 8, %s19
      %p171 = scmp.lt.s32.totalorder %s18, 1
      %s172 = scalar_select %p171, %s18, 1
      %p173 = scmp.lt.s32.totalorder %s170, 31
      %s174 = scalar_select %p173, %s170, 31
      %s175 = smul.addr %s172, 32
      %s176 = sadd.s32 %s174, %s175
      %s177 = smul.addr %s176, 8
      %s178 = scalar_lea.vmem %s3, %s177
      %p179 = scmp.lt.s32.totalorder %s18, 1
      %s180 = scalar_select %p179, %s18, 1
      %s181 = smul.addr %s180, 54
      %s182 = smul.addr %s181, 4
      %s183 = scalar_lea.vmem %s0, %s182
      %s184 = smul.u32 8, %s19
      %p185 = scmp.lt.s32.totalorder %s18, 1
      %s186 = scalar_select %p185, %s18, 1
      %p187 = scmp.lt.s32.totalorder %s184, 31
      %s188 = scalar_select %p187, %s184, 31
      %s189 = smul.addr %s186, 32
      %s190 = sadd.s32 %s188, %s189
      %s191 = smul.addr %s190, 8
      %s192 = scalar_lea.vmem %s3, %s191
      %s193 = smul.u32 8, %s19
      %s195 = smul.u32 %s19, 4
      %s196 = smul.u32 %s195, 3
      %s197 = smul.addr %s196, 4
      %s198 = scalar_lea.vmem %s183, %s197
      %v199 = vld [vmem:[%s198] sm:$0xf]
      %v200 = vld [vmem:[%s198 + $0x4] sm:$0xf]
      %v201 = vld [vmem:[%s198 + $0x8] sm:$0x1]
      %v202 = vld [vmem:[%s198 + $0xc] sm:$0xf]
      %v203 = vld [vmem:[%s198 + $0x10] sm:$0xf]
      %v204 = vld [vmem:[%s198 + $0x14] sm:$0x1]
      %v205 = vld [vmem:[%s198 + $0x18] sm:$0xf]
      %v206 = vld [vmem:[%s198 + $0x1c] sm:$0xf]
      %v207 = vld [vmem:[%s198 + $0x20] sm:$0x1]
      %v208 = vld [vmem:[%s198 + $0x24] sm:$0xf]
      %v209 = vld [vmem:[%s198 + $0x28] sm:$0xf]
      %v210 = vld [vmem:[%s198 + $0x2c] sm:$0x1]
      %v211 = vld [vmem:[%s198 + $0x30] sm:$0xf]
      %v212 = vld [vmem:[%s198 + $0x34] sm:$0xf]
      %v213 = vld [vmem:[%s198 + $0x38] sm:$0x1]
      %v214 = vld [vmem:[%s198 + $0x3c] sm:$0xf]
      %v215 = vld [vmem:[%s198 + $0x40] sm:$0xf]
      %v216 = vld [vmem:[%s198 + $0x44] sm:$0x1]
      %vm217 = vsmask.f32 3328
      %vm218 = vsmask.f32 7440
      %vm219 = vmor %vm217, %vm218
      %v221 = vshrl.u32 %v199, 16
      %v223 = vrot.slane %v221, 4
      %v224 = vshll.u32 %v199, 16
      %v226 = vrot.slane %v224, 5
      %v227 = vor.u32 %v223, %v226
      %v228 = vrot.slane %v227, 4
      %v230 = vshll.u32 %v200, 16
      %v232 = vrot.slane %v230, 5
      %v233 = vsel %vm219, %v228, %v232
      %v234 = vshrl.u32 %v200, 16
      %v236 = vrot.slane %v234, 4
      %v237 = vor.u32 %v236, %v232
      %v238 = vrot.slane %v237, 4
      %v240 = vshll.u32 %v201, 16
      %v242 = vrot.slane %v240, 5
      %v243 = vsel %vm219, %v238, %v242
      %v245 = vshrl.u32 %v202, 16
      %v247 = vrot.slane %v245, 4
      %v248 = vshll.u32 %v202, 16
      %v250 = vrot.slane %v248, 5
      %v251 = vor.u32 %v247, %v250
      %v252 = vrot.slane %v251, 4
      %v254 = vshll.u32 %v203, 16
      %v256 = vrot.slane %v254, 5
      %v257 = vsel %vm219, %v252, %v256
      %v258 = vshrl.u32 %v203, 16
      %v260 = vrot.slane %v258, 4
      %v261 = vor.u32 %v260, %v256
      %v262 = vrot.slane %v261, 4
      %v264 = vshll.u32 %v204, 16
      %v266 = vrot.slane %v264, 5
      %v267 = vsel %vm219, %v262, %v266
      %v269 = vshrl.u32 %v205, 16
      %v271 = vrot.slane %v269, 4
      %v272 = vshll.u32 %v205, 16
      %v274 = vrot.slane %v272, 5
      %v275 = vor.u32 %v271, %v274
      %v276 = vrot.slane %v275, 4
      %v278 = vshll.u32 %v206, 16
      %v280 = vrot.slane %v278, 5
      %v281 = vsel %vm219, %v276, %v280
      %v282 = vshrl.u32 %v206, 16
      %v284 = vrot.slane %v282, 4
      %v285 = vor.u32 %v284, %v280
      %v286 = vrot.slane %v285, 4
      %v288 = vshll.u32 %v207, 16
      %v290 = vrot.slane %v288, 5
      %v291 = vsel %vm219, %v286, %v290
      %v293 = vshrl.u32 %v208, 16
      %v295 = vrot.slane %v293, 4
      %v296 = vshll.u32 %v208, 16
      %v298 = vrot.slane %v296, 5
      %v299 = vor.u32 %v295, %v298
      %v300 = vrot.slane %v299, 4
      %v302 = vshll.u32 %v209, 16
      %v304 = vrot.slane %v302, 5
      %v305 = vsel %vm219, %v300, %v304
      %v306 = vshrl.u32 %v209, 16
      %v308 = vrot.slane %v306, 4
      %v309 = vor.u32 %v308, %v304
      %v310 = vrot.slane %v309, 4
      %v312 = vshll.u32 %v210, 16
      %v314 = vrot.slane %v312, 5
      %v315 = vsel %vm219, %v310, %v314
      %vm328 = vcmask 1042432
      %vm329 = vcmask 1046532
      %vm330 = vmor %vm328, %vm329
      %v331 = vrot.slane %v199, 5
      %v332 = vrot.slane %v331, 4
      %v333 = vrot.slane %v200, 5
      %v334 = vsel %vm330, %v332, %v333
      %v335 = vrot.slane %v333, 4
      %v336 = vrot.slane %v201, 5
      %v337 = vsel %vm330, %v335, %v336
      %v338 = vrot.slane %v202, 5
      %v339 = vrot.slane %v338, 4
      %v340 = vrot.slane %v203, 5
      %v341 = vsel %vm330, %v339, %v340
      %v342 = vrot.slane %v340, 4
      %v343 = vrot.slane %v204, 5
      %v344 = vsel %vm330, %v342, %v343
      %v345 = vrot.slane %v205, 5
      %v346 = vrot.slane %v345, 4
      %v347 = vrot.slane %v206, 5
      %v348 = vsel %vm330, %v346, %v347
      %v349 = vrot.slane %v347, 4
      %v350 = vrot.slane %v207, 5
      %v351 = vsel %vm330, %v349, %v350
      %v352 = vrot.slane %v208, 5
      %v353 = vrot.slane %v352, 4
      %v354 = vrot.slane %v209, 5
      %v355 = vsel %vm330, %v353, %v354
      %v356 = vrot.slane %v354, 4
      %v357 = vrot.slane %v210, 5
      %v358 = vsel %vm330, %v356, %v357
      %v360 = vshrl.u32 %v211, 16
      %v362 = vrot.slane %v360, 4
      %v363 = vshll.u32 %v211, 16
      %v365 = vrot.slane %v363, 5
      %v366 = vor.u32 %v362, %v365
      %v367 = vrot.slane %v366, 4
      %v369 = vshll.u32 %v212, 16
      %v371 = vrot.slane %v369, 5
      %v372 = vsel %vm219, %v367, %v371
      %v373 = vshrl.u32 %v212, 16
      %v375 = vrot.slane %v373, 4
      %v376 = vor.u32 %v375, %v371
      %v377 = vrot.slane %v376, 4
      %v379 = vshll.u32 %v213, 16
      %v381 = vrot.slane %v379, 5
      %v382 = vsel %vm219, %v377, %v381
      %v386 = vrot.slane %v211, 5
      %v387 = vrot.slane %v386, 4
      %v388 = vrot.slane %v212, 5
      %v389 = vsel %vm330, %v387, %v388
      %v390 = vrot.slane %v388, 4
      %v391 = vrot.slane %v213, 5
      %v392 = vsel %vm330, %v390, %v391
      %v394 = vshrl.u32 %v214, 16
      %v396 = vrot.slane %v394, 4
      %v397 = vshll.u32 %v214, 16
      %v399 = vrot.slane %v397, 5
      %v400 = vor.u32 %v396, %v399
      %v401 = vrot.slane %v400, 4
      %v403 = vshll.u32 %v215, 16
      %v405 = vrot.slane %v403, 5
      %v406 = vsel %vm219, %v401, %v405
      %v407 = vshrl.u32 %v215, 16
      %v409 = vrot.slane %v407, 4
      %v410 = vor.u32 %v409, %v405
      %v411 = vrot.slane %v410, 4
      %v413 = vshll.u32 %v216, 16
      %v415 = vrot.slane %v413, 5
      %v416 = vsel %vm219, %v411, %v415
      %v420 = vrot.slane %v214, 5
      %v421 = vrot.slane %v420, 4
      %v422 = vrot.slane %v215, 5
      %v423 = vsel %vm330, %v421, %v422
      %v424 = vrot.slane %v422, 4
      %v425 = vrot.slane %v216, 5
      %v426 = vsel %vm330, %v424, %v425
      %v427 = vunpack.c.l.b16 %v199
      %v428 = vunpack.c.l.b16 %v200
      %v429 = vunpack.c.l.b16 %v202
      %v430 = vunpack.c.l.b16 %v203
      %v431 = vunpack.c.l.b16 %v205
      %v432 = vunpack.c.l.b16 %v206
      %v433 = vunpack.c.l.b16 %v208
      %v434 = vunpack.c.l.b16 %v209
      %v435 = vpack.c.b16 %v428, %v427
      %v436 = vpack.c.b16 %v430, %v429
      %v437 = vpack.c.b16 %v432, %v431
      %v438 = vpack.c.b16 %v434, %v433
      %v443 = vunpack.c.l.b16 %v233
      %v444 = vunpack.c.l.b16 %v243
      %v445 = vunpack.c.l.b16 %v257
      %v446 = vunpack.c.l.b16 %v267
      %v447 = vunpack.c.l.b16 %v281
      %v448 = vunpack.c.l.b16 %v291
      %v449 = vunpack.c.l.b16 %v305
      %v450 = vunpack.c.l.b16 %v315
      %v451 = vpack.c.b16 %v444, %v443
      %v452 = vpack.c.b16 %v446, %v445
      %v453 = vpack.c.b16 %v448, %v447
      %v454 = vpack.c.b16 %v450, %v449
      %v459 = vunpack.c.l.b16 %v334
      %v460 = vunpack.c.l.b16 %v337
      %v461 = vunpack.c.l.b16 %v341
      %v462 = vunpack.c.l.b16 %v344
      %v463 = vunpack.c.l.b16 %v348
      %v464 = vunpack.c.l.b16 %v351
      %v465 = vunpack.c.l.b16 %v355
      %v466 = vunpack.c.l.b16 %v358
      %v467 = vpack.c.b16 %v460, %v459
      %v468 = vpack.c.b16 %v462, %v461
      %v469 = vpack.c.b16 %v464, %v463
      %v470 = vpack.c.b16 %v466, %v465
      %v475 = vunpack.c.l.b16 %v211
      %v476 = vunpack.c.l.b16 %v212
      %v477 = vpack.c.b16 %v476, %v475
      %v479 = vunpack.c.l.b16 %v372
      %v480 = vunpack.c.l.b16 %v382
      %v481 = vpack.c.b16 %v480, %v479
      %v483 = vunpack.c.l.b16 %v389
      %v484 = vunpack.c.l.b16 %v392
      %v485 = vpack.c.b16 %v484, %v483
      %v487 = vunpack.c.l.b16 %v214
      %v488 = vunpack.c.l.b16 %v215
      %v489 = vpack.c.b16 %v488, %v487
      %v491 = vunpack.c.l.b16 %v406
      %v492 = vunpack.c.l.b16 %v416
      %v493 = vpack.c.b16 %v492, %v491
      %v495 = vunpack.c.l.b16 %v423
      %v496 = vunpack.c.l.b16 %v426
      %v497 = vpack.c.b16 %v496, %v495
      %v499 = vld [vmem:[%s1] sm:$0xf]
      %v500 = vld [vmem:[%s1 + $0x4] sm:$0xf]
      %v501 = vld [vmem:[%s1 + $0x8] sm:$0xf]
      %v502 = vld [vmem:[%s1 + $0xc] sm:$0xf]
      %v503 = vld [vmem:[%s1 + $0x10] sm:$0xf]
      %v504 = vld [vmem:[%s1 + $0x14] sm:$0xf]
      %v505 = vld [vmem:[%s1 + $0x18] sm:$0xf]
      %v506 = vld [vmem:[%s1 + $0x1c] sm:$0xf]
      %v507 = vld [vmem:[%s1 + $0x20] sm:$0xf]
      %v508 = vld [vmem:[%s1 + $0x24] sm:$0xf]
      %v509 = vld [vmem:[%s1 + $0x28] sm:$0xf]
      %v510 = vld [vmem:[%s1 + $0x2c] sm:$0xf]
      %v511 = vld [vmem:[%s1 + $0x30] sm:$0xf]
      %v512 = vld [vmem:[%s1 + $0x34] sm:$0xf]
      %v513 = vld [vmem:[%s1 + $0x38] sm:$0xf]
      %v514 = vld [vmem:[%s1 + $0x3c] sm:$0xf]
      %v515 = vld [vmem:[%s1 + $0x40] sm:$0xf]
      %v516 = vld [vmem:[%s1 + $0x44] sm:$0xf]
      %v517 = vld [vmem:[%s1 + $0x48] sm:$0xf]
      %v518 = vld [vmem:[%s1 + $0x4c] sm:$0xf]
      %v519 = vld [vmem:[%s1 + $0x50] sm:$0xf]
      %v520 = vld [vmem:[%s1 + $0x54] sm:$0xf]
      %v521 = vld [vmem:[%s1 + $0x58] sm:$0xf]
      %v522 = vld [vmem:[%s1 + $0x5c] sm:$0xf]
      %v523 = vld [vmem:[%s1 + $0x60] sm:$0xf]
      %v524 = vld [vmem:[%s1 + $0x64] sm:$0xf]
      %v525 = vld [vmem:[%s1 + $0x68] sm:$0xf]
      %v526 = vld [vmem:[%s1 + $0x6c] sm:$0xf]
      %v527 = vld [vmem:[%s1 + $0x70] sm:$0xf]
      %v528 = vld [vmem:[%s1 + $0x74] sm:$0xf]
      %v529 = vld [vmem:[%s1 + $0x78] sm:$0xf]
      %v530 = vld [vmem:[%s1 + $0x7c] sm:$0xf]
      %v531 = vld [vmem:[%s1 + $0x80] sm:$0xf]
      %v532 = vld [vmem:[%s1 + $0x84] sm:$0xf]
      %v533 = vld [vmem:[%s1 + $0x88] sm:$0xf]
      %v534 = vld [vmem:[%s1 + $0x8c] sm:$0xf]
      %v535 = vld [vmem:[%s1 + $0x90] sm:$0xf]
      %v536 = vld [vmem:[%s1 + $0x94] sm:$0xf]
      %v537 = vld [vmem:[%s1 + $0x98] sm:$0xf]
      %v538 = vld [vmem:[%s1 + $0x9c] sm:$0xf]
      %v539 = vld [vmem:[%s1 + $0xa0] sm:$0xf]
      %v540 = vld [vmem:[%s1 + $0xa4] sm:$0xf]
      %v541 = vld [vmem:[%s1 + $0xa8] sm:$0xf]
      %v542 = vld [vmem:[%s1 + $0xac] sm:$0xf]
      %v543 = vld [vmem:[%s1 + $0xb0] sm:$0xf]
      %v544 = vld [vmem:[%s1 + $0xb4] sm:$0xf]
      %v545 = vld [vmem:[%s1 + $0xb8] sm:$0xf]
      %v546 = vld [vmem:[%s1 + $0xbc] sm:$0xf]
      %v547 = vld [vmem:[%s1 + $0xc0] sm:$0xf]
      %v548 = vld [vmem:[%s1 + $0xc4] sm:$0xf]
      %v549 = vld [vmem:[%s1 + $0xc8] sm:$0xf]
      %v550 = vld [vmem:[%s1 + $0xcc] sm:$0xf]
      %v551 = vld [vmem:[%s1 + $0xd0] sm:$0xf]
      %v552 = vld [vmem:[%s1 + $0xd4] sm:$0xf]
      %v553 = vld [vmem:[%s1 + $0xd8] sm:$0xf]
      %v554 = vld [vmem:[%s1 + $0xdc] sm:$0xf]
      %v555 = vld [vmem:[%s1 + $0xe0] sm:$0xf]
      %v556 = vld [vmem:[%s1 + $0xe4] sm:$0xf]
      %v557 = vld [vmem:[%s1 + $0xe8] sm:$0xf]
      %v558 = vld [vmem:[%s1 + $0xec] sm:$0xf]
      %v559 = vld [vmem:[%s1 + $0xf0] sm:$0xf]
      %v560 = vld [vmem:[%s1 + $0xf4] sm:$0xf]
      %v561 = vld [vmem:[%s1 + $0xf8] sm:$0xf]
      %v562 = vld [vmem:[%s1 + $0xfc] sm:$0xf]
      %v563 = vld [vmem:[%s1 + $0x100] sm:$0xf]
      %v564 = vld [vmem:[%s1 + $0x104] sm:$0xf]
      %v565 = vld [vmem:[%s1 + $0x108] sm:$0xf]
      %v566 = vld [vmem:[%s1 + $0x10c] sm:$0xf]
      %v567 = vld [vmem:[%s1 + $0x110] sm:$0xf]
      %v568 = vld [vmem:[%s1 + $0x114] sm:$0xf]
      %v569 = vld [vmem:[%s1 + $0x118] sm:$0xf]
      %v570 = vld [vmem:[%s1 + $0x11c] sm:$0xf]
      %v571 = vld [vmem:[%s1 + $0x120] sm:$0xf]
      %v572 = vld [vmem:[%s1 + $0x124] sm:$0xf]
      %v573 = vld [vmem:[%s1 + $0x128] sm:$0xf]
      %v574 = vld [vmem:[%s1 + $0x12c] sm:$0xf]
      %v575 = vld [vmem:[%s1 + $0x130] sm:$0xf]
      %v576 = vld [vmem:[%s1 + $0x134] sm:$0xf]
      %v577 = vld [vmem:[%s1 + $0x138] sm:$0xf]
      %v578 = vld [vmem:[%s1 + $0x13c] sm:$0xf]
      %v579 = vld [vmem:[%s1 + $0x140] sm:$0xf]
      %v580 = vld [vmem:[%s1 + $0x144] sm:$0xf]
      %v581 = vld [vmem:[%s1 + $0x148] sm:$0xf]
      %v582 = vld [vmem:[%s1 + $0x14c] sm:$0xf]
      %v583 = vld [vmem:[%s1 + $0x150] sm:$0xf]
      %v584 = vld [vmem:[%s1 + $0x154] sm:$0xf]
      %v585 = vld [vmem:[%s1 + $0x158] sm:$0xf]
      %v586 = vld [vmem:[%s1 + $0x15c] sm:$0xf]
      %v587 = vld [vmem:[%s1 + $0x160] sm:$0xf]
      %v588 = vld [vmem:[%s1 + $0x164] sm:$0xf]
      %v589 = vld [vmem:[%s1 + $0x168] sm:$0xf]
      %v590 = vld [vmem:[%s1 + $0x16c] sm:$0xf]
      %v591 = vld [vmem:[%s1 + $0x170] sm:$0xf]
      %v592 = vld [vmem:[%s1 + $0x174] sm:$0xf]
      %v593 = vld [vmem:[%s1 + $0x178] sm:$0xf]
      %v594 = vld [vmem:[%s1 + $0x17c] sm:$0xf]
      %v595 = vld [vmem:[%s1 + $0x180] sm:$0xf]
      %v596 = vld [vmem:[%s1 + $0x184] sm:$0xf]
      %v597 = vld [vmem:[%s1 + $0x188] sm:$0xf]
      %v598 = vld [vmem:[%s1 + $0x18c] sm:$0xf]
      %v599 = vld [vmem:[%s1 + $0x190] sm:$0xf]
      %v600 = vld [vmem:[%s1 + $0x194] sm:$0xf]
      %v601 = vld [vmem:[%s1 + $0x198] sm:$0xf]
      %v602 = vld [vmem:[%s1 + $0x19c] sm:$0xf]
      %v603 = vld [vmem:[%s1 + $0x1a0] sm:$0xf]
      %v604 = vld [vmem:[%s1 + $0x1a4] sm:$0xf]
      %v605 = vld [vmem:[%s1 + $0x1a8] sm:$0xf]
      %v606 = vld [vmem:[%s1 + $0x1ac] sm:$0xf]
      %v607 = vld [vmem:[%s1 + $0x1b0] sm:$0xf]
      %v608 = vld [vmem:[%s1 + $0x1b4] sm:$0xf]
      %v609 = vld [vmem:[%s1 + $0x1b8] sm:$0xf]
      %v610 = vld [vmem:[%s1 + $0x1bc] sm:$0xf]
      %v611 = vld [vmem:[%s1 + $0x1c0] sm:$0xf]
      %v612 = vld [vmem:[%s1 + $0x1c4] sm:$0xf]
      %v613 = vld [vmem:[%s1 + $0x1c8] sm:$0xf]
      %v614 = vld [vmem:[%s1 + $0x1cc] sm:$0xf]
      %v615 = vld [vmem:[%s1 + $0x1d0] sm:$0xf]
      %v616 = vld [vmem:[%s1 + $0x1d4] sm:$0xf]
      %v617 = vld [vmem:[%s1 + $0x1d8] sm:$0xf]
      %v618 = vld [vmem:[%s1 + $0x1dc] sm:$0xf]
      %v619 = vld [vmem:[%s1 + $0x1e0] sm:$0xf]
      %v620 = vld [vmem:[%s1 + $0x1e4] sm:$0xf]
      %v621 = vld [vmem:[%s1 + $0x1e8] sm:$0xf]
      %v622 = vld [vmem:[%s1 + $0x1ec] sm:$0xf]
      %v623 = vld [vmem:[%s1 + $0x1f0] sm:$0xf]
      %v624 = vld [vmem:[%s1 + $0x1f4] sm:$0xf]
      %v625 = vld [vmem:[%s1 + $0x1f8] sm:$0xf]
      %v626 = vld [vmem:[%s1 + $0x1fc] sm:$0xf]
      %v627 = vld [vmem:[%s1 + $0x200] sm:$0xf]
      %v628 = vld [vmem:[%s1 + $0x204] sm:$0xf]
      %v629 = vld [vmem:[%s1 + $0x208] sm:$0xf]
      %v630 = vld [vmem:[%s1 + $0x20c] sm:$0xf]
      %v631 = vld [vmem:[%s1 + $0x210] sm:$0xf]
      %v632 = vld [vmem:[%s1 + $0x214] sm:$0xf]
      %v633 = vld [vmem:[%s1 + $0x218] sm:$0xf]
      %v634 = vld [vmem:[%s1 + $0x21c] sm:$0xf]
      %v635 = vld [vmem:[%s1 + $0x220] sm:$0xf]
      %v636 = vld [vmem:[%s1 + $0x224] sm:$0xf]
      %v637 = vld [vmem:[%s1 + $0x228] sm:$0xf]
      %v638 = vld [vmem:[%s1 + $0x22c] sm:$0xf]
      %v639 = vld [vmem:[%s1 + $0x230] sm:$0xf]
      %v640 = vld [vmem:[%s1 + $0x234] sm:$0xf]
      %v641 = vld [vmem:[%s1 + $0x238] sm:$0xf]
      %v642 = vld [vmem:[%s1 + $0x23c] sm:$0xf]
      %v643 = vld [vmem:[%s2] sm:$0x1]
      %v645 = vlaneseq
      %v646 = vshrl.u32 %v645, 7
      %v647 = vsub.s32 0, %v646
      %v648 = vrot.slane %v643, %v647
      %v794 = vunpack.c.l.b16 %v499
      %v795 = vunpack.c.l.b16 %v500
      %v796 = vunpack.c.l.b16 %v501
      %v797 = vunpack.c.l.b16 %v502
      %v798 = vunpack.c.l.b16 %v503
      %v799 = vunpack.c.l.b16 %v504
      %v800 = vunpack.c.l.b16 %v505
      %v801 = vunpack.c.l.b16 %v506
      %v802 = vunpack.c.l.b16 %v507
      %v803 = vunpack.c.l.b16 %v508
      %v804 = vunpack.c.l.b16 %v509
      %v805 = vunpack.c.l.b16 %v510
      %v806 = vunpack.c.l.b16 %v511
      %v807 = vunpack.c.l.b16 %v512
      %v808 = vunpack.c.l.b16 %v513
      %v809 = vunpack.c.l.b16 %v514
      %v810 = vunpack.c.l.b16 %v515
      %v811 = vunpack.c.l.b16 %v516
      %v812 = vunpack.c.l.b16 %v517
      %v813 = vunpack.c.l.b16 %v518
      %v814 = vunpack.c.l.b16 %v519
      %v815 = vunpack.c.l.b16 %v520
      %v816 = vunpack.c.l.b16 %v521
      %v817 = vunpack.c.l.b16 %v522
      %v818 = vunpack.c.l.b16 %v523
      %v819 = vunpack.c.l.b16 %v524
      %v820 = vunpack.c.l.b16 %v525
      %v821 = vunpack.c.l.b16 %v526
      %v822 = vunpack.c.l.b16 %v527
      %v823 = vunpack.c.l.b16 %v528
      %v824 = vunpack.c.l.b16 %v529
      %v825 = vunpack.c.l.b16 %v530
      %v826 = vunpack.c.l.b16 %v531
      %v827 = vunpack.c.l.b16 %v532
      %v828 = vunpack.c.l.b16 %v533
      %v829 = vunpack.c.l.b16 %v534
      %v830 = vunpack.c.l.b16 %v535
      %v831 = vunpack.c.l.b16 %v536
      %v832 = vunpack.c.l.b16 %v537
      %v833 = vunpack.c.l.b16 %v538
      %v834 = vunpack.c.l.b16 %v539
      %v835 = vunpack.c.l.b16 %v540
      %v836 = vunpack.c.l.b16 %v541
      %v837 = vunpack.c.l.b16 %v542
      %v838 = vunpack.c.l.b16 %v543
      %v839 = vunpack.c.l.b16 %v544
      %v840 = vunpack.c.l.b16 %v545
      %v841 = vunpack.c.l.b16 %v546
      %v842 = vunpack.c.l.b16 %v547
      %v843 = vunpack.c.l.b16 %v548
      %v844 = vunpack.c.l.b16 %v549
      %v845 = vunpack.c.l.b16 %v550
      %v846 = vunpack.c.l.b16 %v551
      %v847 = vunpack.c.l.b16 %v552
      %v848 = vunpack.c.l.b16 %v553
      %v849 = vunpack.c.l.b16 %v554
      %v850 = vunpack.c.l.b16 %v555
      %v851 = vunpack.c.l.b16 %v556
      %v852 = vunpack.c.l.b16 %v557
      %v853 = vunpack.c.l.b16 %v558
      %v854 = vunpack.c.l.b16 %v559
      %v855 = vunpack.c.l.b16 %v560
      %v856 = vunpack.c.l.b16 %v561
      %v857 = vunpack.c.l.b16 %v562
      %v858 = vunpack.c.l.b16 %v563
      %v859 = vunpack.c.l.b16 %v564
      %v860 = vunpack.c.l.b16 %v565
      %v861 = vunpack.c.l.b16 %v566
      %v862 = vunpack.c.l.b16 %v567
      %v863 = vunpack.c.l.b16 %v568
      %v864 = vunpack.c.l.b16 %v569
      %v865 = vunpack.c.l.b16 %v570
      %v866 = vunpack.c.l.b16 %v571
      %v867 = vunpack.c.l.b16 %v572
      %v868 = vunpack.c.l.b16 %v573
      %v869 = vunpack.c.l.b16 %v574
      %v870 = vunpack.c.l.b16 %v575
      %v871 = vunpack.c.l.b16 %v576
      %v872 = vunpack.c.l.b16 %v577
      %v873 = vunpack.c.l.b16 %v578
      %v874 = vunpack.c.l.b16 %v579
      %v875 = vunpack.c.l.b16 %v580
      %v876 = vunpack.c.l.b16 %v581
      %v877 = vunpack.c.l.b16 %v582
      %v878 = vunpack.c.l.b16 %v583
      %v879 = vunpack.c.l.b16 %v584
      %v880 = vunpack.c.l.b16 %v585
      %v881 = vunpack.c.l.b16 %v586
      %v882 = vunpack.c.l.b16 %v587
      %v883 = vunpack.c.l.b16 %v588
      %v884 = vunpack.c.l.b16 %v589
      %v885 = vunpack.c.l.b16 %v590
      %v886 = vunpack.c.l.b16 %v591
      %v887 = vunpack.c.l.b16 %v592
      %v888 = vunpack.c.l.b16 %v593
      %v889 = vunpack.c.l.b16 %v594
      %v890 = vunpack.c.l.b16 %v595
      %v891 = vunpack.c.l.b16 %v596
      %v892 = vunpack.c.l.b16 %v597
      %v893 = vunpack.c.l.b16 %v598
      %v894 = vunpack.c.l.b16 %v599
      %v895 = vunpack.c.l.b16 %v600
      %v896 = vunpack.c.l.b16 %v601
      %v897 = vunpack.c.l.b16 %v602
      %v898 = vunpack.c.l.b16 %v603
      %v899 = vunpack.c.l.b16 %v604
      %v900 = vunpack.c.l.b16 %v605
      %v901 = vunpack.c.l.b16 %v606
      %v902 = vunpack.c.l.b16 %v607
      %v903 = vunpack.c.l.b16 %v608
      %v904 = vunpack.c.l.b16 %v609
      %v905 = vunpack.c.l.b16 %v610
      %v906 = vunpack.c.l.b16 %v611
      %v907 = vunpack.c.l.b16 %v612
      %v908 = vunpack.c.l.b16 %v613
      %v909 = vunpack.c.l.b16 %v614
      %v910 = vunpack.c.l.b16 %v615
      %v911 = vunpack.c.l.b16 %v616
      %v912 = vunpack.c.l.b16 %v617
      %v913 = vunpack.c.l.b16 %v618
      %v914 = vunpack.c.l.b16 %v619
      %v915 = vunpack.c.l.b16 %v620
      %v916 = vunpack.c.l.b16 %v621
      %v917 = vunpack.c.l.b16 %v622
      %v918 = vunpack.c.l.b16 %v623
      %v919 = vunpack.c.l.b16 %v624
      %v920 = vunpack.c.l.b16 %v625
      %v921 = vunpack.c.l.b16 %v626
      %v922 = vunpack.c.l.b16 %v627
      %v923 = vunpack.c.l.b16 %v628
      %v924 = vunpack.c.l.b16 %v629
      %v925 = vunpack.c.l.b16 %v630
      %v926 = vunpack.c.l.b16 %v631
      %v927 = vunpack.c.l.b16 %v632
      %v928 = vunpack.c.l.b16 %v633
      %v929 = vunpack.c.l.b16 %v634
      %v930 = vunpack.c.l.b16 %v635
      %v931 = vunpack.c.l.b16 %v636
      %v932 = vunpack.c.l.b16 %v637
      %v933 = vunpack.c.l.b16 %v638
      %v934 = vunpack.c.l.b16 %v639
      %v935 = vunpack.c.l.b16 %v640
      %v936 = vunpack.c.l.b16 %v641
      %v937 = vunpack.c.l.b16 %v642
      %v938 = vpack.c.b16 %v795, %v794
      %v939 = vpack.c.b16 %v797, %v796
      %v940 = vpack.c.b16 %v799, %v798
      %v941 = vpack.c.b16 %v801, %v800
      %v942 = vpack.c.b16 %v803, %v802
      %v943 = vpack.c.b16 %v805, %v804
      %v944 = vpack.c.b16 %v807, %v806
      %v945 = vpack.c.b16 %v809, %v808
      %v946 = vpack.c.b16 %v811, %v810
      %v947 = vpack.c.b16 %v813, %v812
      %v948 = vpack.c.b16 %v815, %v814
      %v949 = vpack.c.b16 %v817, %v816
      %v950 = vpack.c.b16 %v819, %v818
      %v951 = vpack.c.b16 %v821, %v820
      %v952 = vpack.c.b16 %v823, %v822
      %v953 = vpack.c.b16 %v825, %v824
      %v954 = vpack.c.b16 %v827, %v826
      %v955 = vpack.c.b16 %v829, %v828
      %v956 = vpack.c.b16 %v831, %v830
      %v957 = vpack.c.b16 %v833, %v832
      %v958 = vpack.c.b16 %v835, %v834
      %v959 = vpack.c.b16 %v837, %v836
      %v960 = vpack.c.b16 %v839, %v838
      %v961 = vpack.c.b16 %v841, %v840
      %v962 = vpack.c.b16 %v843, %v842
      %v963 = vpack.c.b16 %v845, %v844
      %v964 = vpack.c.b16 %v847, %v846
      %v965 = vpack.c.b16 %v849, %v848
      %v966 = vpack.c.b16 %v851, %v850
      %v967 = vpack.c.b16 %v853, %v852
      %v968 = vpack.c.b16 %v855, %v854
      %v969 = vpack.c.b16 %v857, %v856
      %v970 = vpack.c.b16 %v859, %v858
      %v971 = vpack.c.b16 %v861, %v860
      %v972 = vpack.c.b16 %v863, %v862
      %v973 = vpack.c.b16 %v865, %v864
      %v974 = vpack.c.b16 %v867, %v866
      %v975 = vpack.c.b16 %v869, %v868
      %v976 = vpack.c.b16 %v871, %v870
      %v977 = vpack.c.b16 %v873, %v872
      %v978 = vpack.c.b16 %v875, %v874
      %v979 = vpack.c.b16 %v877, %v876
      %v980 = vpack.c.b16 %v879, %v878
      %v981 = vpack.c.b16 %v881, %v880
      %v982 = vpack.c.b16 %v883, %v882
      %v983 = vpack.c.b16 %v885, %v884
      %v984 = vpack.c.b16 %v887, %v886
      %v985 = vpack.c.b16 %v889, %v888
      %v986 = vpack.c.b16 %v891, %v890
      %v987 = vpack.c.b16 %v893, %v892
      %v988 = vpack.c.b16 %v895, %v894
      %v989 = vpack.c.b16 %v897, %v896
      %v990 = vpack.c.b16 %v899, %v898
      %v991 = vpack.c.b16 %v901, %v900
      %v992 = vpack.c.b16 %v903, %v902
      %v993 = vpack.c.b16 %v905, %v904
      %v994 = vpack.c.b16 %v907, %v906
      %v995 = vpack.c.b16 %v909, %v908
      %v996 = vpack.c.b16 %v911, %v910
      %v997 = vpack.c.b16 %v913, %v912
      %v998 = vpack.c.b16 %v915, %v914
      %v999 = vpack.c.b16 %v917, %v916
      %v1000 = vpack.c.b16 %v919, %v918
      %v1001 = vpack.c.b16 %v921, %v920
      %v1002 = vpack.c.b16 %v923, %v922
      %v1003 = vpack.c.b16 %v925, %v924
      %v1004 = vpack.c.b16 %v927, %v926
      %v1005 = vpack.c.b16 %v929, %v928
      %v1006 = vpack.c.b16 %v931, %v930
      %v1007 = vpack.c.b16 %v933, %v932
      %v1008 = vpack.c.b16 %v935, %v934
      %v1009 = vpack.c.b16 %v937, %v936
      %1082 = vmatprep.subr.bf16.mxu0 0
      %1083 = vmatpush1.bf16.msra.mxu0 %v938
      %1084 = vmatprep.subr.bf16.mxu0 0
      %1085 = vmatpush1.bf16.msra.mxu0 %v939
      %1086 = vmatprep.subr.bf16.mxu0 0
      %1087 = vmatpush1.bf16.msra.mxu0 %v940
      %1088 = vmatprep.subr.bf16.mxu0 0
      %1089 = vmatpush1.bf16.msra.mxu0 %v941
      %1090 = vmatprep.subr.bf16.mxu0 0
      %1091 = vmatpush1.bf16.msra.mxu0 %v942
      %1092 = vmatprep.subr.bf16.mxu0 0
      %1093 = vmatpush1.bf16.msra.mxu0 %v943
      %1094 = vmatprep.subr.bf16.mxu0 0
      %1095 = vmatpush1.bf16.msra.mxu0 %v944
      %1096 = vmatprep.subr.bf16.mxu0 0
      %1097 = vmatpush1.bf16.msra.mxu0 %v945
      %1098 = vmatprep.subr.bf16.mxu0 0
      %1099 = vmatpush1.bf16.msra.mxu0 %v946
      %1100 = vmatprep.subr.bf16.mxu0 0
      %1101 = vmatpush1.bf16.msra.mxu0 %v947
      %1102 = vmatprep.subr.bf16.mxu0 0
      %1103 = vmatpush1.bf16.msra.mxu0 %v948
      %1104 = vmatprep.subr.bf16.mxu0 0
      %1105 = vmatpush1.bf16.msra.mxu0 %v949
      %1106 = vmatprep.subr.bf16.mxu0 0
      %1107 = vmatpush1.bf16.msra.mxu0 %v950
      %1108 = vmatprep.subr.bf16.mxu0 0
      %1109 = vmatpush1.bf16.msra.mxu0 %v951
      %1110 = vmatprep.subr.bf16.mxu0 0
      %1111 = vmatpush1.bf16.msra.mxu0 %v952
      %1112 = vmatprep.subr.bf16.mxu0 0
      %1113 = vmatpush1.bf16.msra.mxu0 %v953
      %1114 = vmatprep.mubr.bf16.mxu0 %v451
      %1115 = vmatmul.mubr.bf16.gmra.mrb[0].mxu0 %v435
      %v1116 = vpop.f32.mrb[0].mxu0
      %v1117 = vadd.f32 %v648, %v1116
      %v1118 = vpop.f32.mrb[0].mxu0
      %v1119 = vpop.f32.mrb[0].mxu0
      %v1120 = vadd.f32 %v648, %v1119
      %v1121 = vpop.f32.mrb[0].mxu0
      %1122 = vmatprep.mubr.bf16.mxu0 %v452
      %1123 = vmatmul.mubr.bf16.gmra.mrb[0].mxu0 %v436
      %v1124 = vpop.f32.mrb[0].mxu0
      %v1125 = vadd.f32 %v648, %v1124
      %v1126 = vpop.f32.mrb[0].mxu0
      %v1127 = vpop.f32.mrb[0].mxu0
      %v1128 = vadd.f32 %v648, %v1127
      %v1129 = vpop.f32.mrb[0].mxu0
      %1130 = vmatprep.mubr.bf16.mxu0 %v453
      %1131 = vmatmul.mubr.bf16.gmra.mrb[0].mxu0 %v437
      %v1132 = vpop.f32.mrb[0].mxu0
      %v1133 = vadd.f32 %v648, %v1132
      %v1134 = vpop.f32.mrb[0].mxu0
      %v1135 = vpop.f32.mrb[0].mxu0
      %v1136 = vadd.f32 %v648, %v1135
      %v1137 = vpop.f32.mrb[0].mxu0
      %1138 = vmatprep.mubr.bf16.mxu0 %v454
      %1139 = vmatmul.mubr.bf16.gmra.mrb[0].mxu0 %v438
      %v1140 = vpop.f32.mrb[0].mxu0
      %v1141 = vadd.f32 %v648, %v1140
      %v1142 = vpop.f32.mrb[0].mxu0
      %v1143 = vpop.f32.mrb[0].mxu0
      %v1144 = vadd.f32 %v648, %v1143
      %v1145 = vpop.f32.mrb[0].mxu0
      %1146 = vdwg.mxu0
      %1147 = vmatprep.subr.bf16.mxu0 0
      %1148 = vmatpush1.bf16.msra.mxu0 %v954
      %1149 = vmatprep.subr.bf16.mxu0 0
      %1150 = vmatpush1.bf16.msra.mxu0 %v955
      %1151 = vmatprep.subr.bf16.mxu0 0
      %1152 = vmatpush1.bf16.msra.mxu0 %v956
      %1153 = vmatprep.subr.bf16.mxu0 0
      %1154 = vmatpush1.bf16.msra.mxu0 %v957
      %1155 = vmatprep.subr.bf16.mxu0 0
      %1156 = vmatpush1.bf16.msra.mxu0 %v958
      %1157 = vmatprep.subr.bf16.mxu0 0
      %1158 = vmatpush1.bf16.msra.mxu0 %v959
      %1159 = vmatprep.subr.bf16.mxu0 0
      %1160 = vmatpush1.bf16.msra.mxu0 %v960
      %1161 = vmatprep.subr.bf16.mxu0 0
      %1162 = vmatpush1.bf16.msra.mxu0 %v961
      %1163 = vmatprep.subr.bf16.mxu0 0
      %1164 = vmatpush1.bf16.msra.mxu0 %v962
      %1165 = vmatprep.subr.bf16.mxu0 0
      %1166 = vmatpush1.bf16.msra.mxu0 %v963
      %1167 = vmatprep.subr.bf16.mxu0 0
      %1168 = vmatpush1.bf16.msra.mxu0 %v964
      %1169 = vmatprep.subr.bf16.mxu0 0
      %1170 = vmatpush1.bf16.msra.mxu0 %v965
      %1171 = vmatprep.subr.bf16.mxu0 0
      %1172 = vmatpush1.bf16.msra.mxu0 %v966
      %1173 = vmatprep.subr.bf16.mxu0 0
      %1174 = vmatpush1.bf16.msra.mxu0 %v967
      %1175 = vmatprep.subr.bf16.mxu0 0
      %1176 = vmatpush1.bf16.msra.mxu0 %v968
      %1177 = vmatprep.subr.bf16.mxu0 0
      %1178 = vmatpush1.bf16.msra.mxu0 %v969
      %1179 = vmatprep.mubr.bf16.mxu0 %v436
      %1180 = vmatmul.mubr.bf16.gmra.mrb[0].mxu0 %v467
      %v1181 = vpop.f32.mrb[0].mxu0
      %v1182 = vadd.f32 %v1117, %v1181
      %v1183 = vpop.f32.mrb[0].mxu0
      %v1184 = vpop.f32.mrb[0].mxu0
      %v1185 = vadd.f32 %v1120, %v1184
      %v1186 = vpop.f32.mrb[0].mxu0
      %1187 = vmatprep.mubr.bf16.mxu0 %v437
      %1188 = vmatmul.mubr.bf16.gmra.mrb[0].mxu0 %v468
      %v1189 = vpop.f32.mrb[0].mxu0
      %v1190 = vadd.f32 %v1125, %v1189
      %v1191 = vpop.f32.mrb[0].mxu0
      %v1192 = vpop.f32.mrb[0].mxu0
      %v1193 = vadd.f32 %v1128, %v1192
      %v1194 = vpop.f32.mrb[0].mxu0
      %1195 = vmatprep.mubr.bf16.mxu0 %v438
      %1196 = vmatmul.mubr.bf16.gmra.mrb[0].mxu0 %v469
      %v1197 = vpop.f32.mrb[0].mxu0
      %v1198 = vadd.f32 %v1133, %v1197
      %v1199 = vpop.f32.mrb[0].mxu0
      %v1200 = vpop.f32.mrb[0].mxu0
      %v1201 = vadd.f32 %v1136, %v1200
      %v1202 = vpop.f32.mrb[0].mxu0
      %1203 = vmatprep.mubr.bf16.mxu0 %v477
      %1204 = vmatmul.mubr.bf16.gmra.mrb[0].mxu0 %v470
      %v1205 = vpop.f32.mrb[0].mxu0
      %v1206 = vadd.f32 %v1141, %v1205
      %v1207 = vpop.f32.mrb[0].mxu0
      %v1208 = vpop.f32.mrb[0].mxu0
      %v1209 = vadd.f32 %v1144, %v1208
      %v1210 = vpop.f32.mrb[0].mxu0
      %1211 = vdwg.mxu0
      %1212 = vmatprep.subr.bf16.mxu0 0
      %1213 = vmatpush1.bf16.msra.mxu0 %v970
      %1214 = vmatprep.subr.bf16.mxu0 0
      %1215 = vmatpush1.bf16.msra.mxu0 %v971
      %1216 = vmatprep.subr.bf16.mxu0 0
      %1217 = vmatpush1.bf16.msra.mxu0 %v972
      %1218 = vmatprep.subr.bf16.mxu0 0
      %1219 = vmatpush1.bf16.msra.mxu0 %v973
      %1220 = vmatprep.subr.bf16.mxu0 0
      %1221 = vmatpush1.bf16.msra.mxu0 %v974
      %1222 = vmatprep.subr.bf16.mxu0 0
      %1223 = vmatpush1.bf16.msra.mxu0 %v975
      %1224 = vmatprep.subr.bf16.mxu0 0
      %1225 = vmatpush1.bf16.msra.mxu0 %v976
      %1226 = vmatprep.subr.bf16.mxu0 0
      %1227 = vmatpush1.bf16.msra.mxu0 %v977
      %1228 = vmatprep.subr.bf16.mxu0 0
      %1229 = vmatpush1.bf16.msra.mxu0 %v978
      %1230 = vmatprep.subr.bf16.mxu0 0
      %1231 = vmatpush1.bf16.msra.mxu0 %v979
      %1232 = vmatprep.subr.bf16.mxu0 0
      %1233 = vmatpush1.bf16.msra.mxu0 %v980
      %1234 = vmatprep.subr.bf16.mxu0 0
      %1235 = vmatpush1.bf16.msra.mxu0 %v981
      %1236 = vmatprep.subr.bf16.mxu0 0
      %1237 = vmatpush1.bf16.msra.mxu0 %v982
      %1238 = vmatprep.subr.bf16.mxu0 0
      %1239 = vmatpush1.bf16.msra.mxu0 %v983
      %1240 = vmatprep.subr.bf16.mxu0 0
      %1241 = vmatpush1.bf16.msra.mxu0 %v984
      %1242 = vmatprep.subr.bf16.mxu0 0
      %1243 = vmatpush1.bf16.msra.mxu0 %v985
      %1244 = vmatprep.mubr.bf16.mxu0 %v468
      %1245 = vmatmul.mubr.bf16.gmra.mrb[0].mxu0 %v452
      %v1246 = vpop.f32.mrb[0].mxu0
      %v1247 = vadd.f32 %v1182, %v1246
      %v1248 = vpop.f32.mrb[0].mxu0
      %v1249 = vpop.f32.mrb[0].mxu0
      %v1250 = vadd.f32 %v1185, %v1249
      %v1251 = vpop.f32.mrb[0].mxu0
      %1252 = vmatprep.mubr.bf16.mxu0 %v469
      %1253 = vmatmul.mubr.bf16.gmra.mrb[0].mxu0 %v453
      %v1254 = vpop.f32.mrb[0].mxu0
      %v1255 = vadd.f32 %v1190, %v1254
      %v1256 = vpop.f32.mrb[0].mxu0
      %v1257 = vpop.f32.mrb[0].mxu0
      %v1258 = vadd.f32 %v1193, %v1257
      %v1259 = vpop.f32.mrb[0].mxu0
      %1260 = vmatprep.mubr.bf16.mxu0 %v470
      %1261 = vmatmul.mubr.bf16.gmra.mrb[0].mxu0 %v454
      %v1262 = vpop.f32.mrb[0].mxu0
      %v1263 = vadd.f32 %v1198, %v1262
      %v1264 = vpop.f32.mrb[0].mxu0
      %v1265 = vpop.f32.mrb[0].mxu0
      %v1266 = vadd.f32 %v1201, %v1265
      %v1267 = vpop.f32.mrb[0].mxu0
      %1268 = vmatprep.mubr.bf16.mxu0 %v485
      %1269 = vmatmul.mubr.bf16.gmra.mrb[0].mxu0 %v481
      %v1270 = vpop.f32.mrb[0].mxu0
      %v1271 = vadd.f32 %v1206, %v1270
      %v1272 = vpop.f32.mrb[0].mxu0
      %v1273 = vpop.f32.mrb[0].mxu0
      %v1274 = vadd.f32 %v1209, %v1273
      %v1275 = vpop.f32.mrb[0].mxu0
      %1276 = vdwg.mxu0
      %1277 = vmatprep.subr.bf16.mxu0 0
      %1278 = vmatpush1.bf16.msra.mxu0 %v986
      %1279 = vmatprep.subr.bf16.mxu0 0
      %1280 = vmatpush1.bf16.msra.mxu0 %v987
      %1281 = vmatprep.subr.bf16.mxu0 0
      %1282 = vmatpush1.bf16.msra.mxu0 %v988
      %1283 = vmatprep.subr.bf16.mxu0 0
      %1284 = vmatpush1.bf16.msra.mxu0 %v989
      %1285 = vmatprep.subr.bf16.mxu0 0
      %1286 = vmatpush1.bf16.msra.mxu0 %v990
      %1287 = vmatprep.subr.bf16.mxu0 0
      %1288 = vmatpush1.bf16.msra.mxu0 %v991
      %1289 = vmatprep.subr.bf16.mxu0 0
      %1290 = vmatpush1.bf16.msra.mxu0 %v992
      %1291 = vmatprep.subr.bf16.mxu0 0
      %1292 = vmatpush1.bf16.msra.mxu0 %v993
      %1293 = vmatprep.subr.bf16.mxu0 0
      %1294 = vmatpush1.bf16.msra.mxu0 %v994
      %1295 = vmatprep.subr.bf16.mxu0 0
      %1296 = vmatpush1.bf16.msra.mxu0 %v995
      %1297 = vmatprep.subr.bf16.mxu0 0
      %1298 = vmatpush1.bf16.msra.mxu0 %v996
      %1299 = vmatprep.subr.bf16.mxu0 0
      %1300 = vmatpush1.bf16.msra.mxu0 %v997
      %1301 = vmatprep.subr.bf16.mxu0 0
      %1302 = vmatpush1.bf16.msra.mxu0 %v998
      %1303 = vmatprep.subr.bf16.mxu0 0
      %1304 = vmatpush1.bf16.msra.mxu0 %v999
      %1305 = vmatprep.subr.bf16.mxu0 0
      %1306 = vmatpush1.bf16.msra.mxu0 %v1000
      %1307 = vmatprep.subr.bf16.mxu0 0
      %1308 = vmatpush1.bf16.msra.mxu0 %v1001
      %1309 = vmatprep.mubr.bf16.mxu0 %v453
      %1310 = vmatmul.mubr.bf16.gmra.mrb[0].mxu0 %v437
      %v1311 = vpop.f32.mrb[0].mxu0
      %v1312 = vadd.f32 %v1247, %v1311
      %v1313 = vpop.f32.mrb[0].mxu0
      %v1314 = vpop.f32.mrb[0].mxu0
      %v1315 = vadd.f32 %v1250, %v1314
      %v1316 = vpop.f32.mrb[0].mxu0
      %1317 = vmatprep.mubr.bf16.mxu0 %v454
      %1318 = vmatmul.mubr.bf16.gmra.mrb[0].mxu0 %v438
      %v1319 = vpop.f32.mrb[0].mxu0
      %v1320 = vadd.f32 %v1255, %v1319
      %v1321 = vpop.f32.mrb[0].mxu0
      %v1322 = vpop.f32.mrb[0].mxu0
      %v1323 = vadd.f32 %v1258, %v1322
      %v1324 = vpop.f32.mrb[0].mxu0
      %1325 = vmatprep.mubr.bf16.mxu0 %v481
      %1326 = vmatmul.mubr.bf16.gmra.mrb[0].mxu0 %v477
      %v1327 = vpop.f32.mrb[0].mxu0
      %v1328 = vadd.f32 %v1263, %v1327
      %v1329 = vpop.f32.mrb[0].mxu0
      %v1330 = vpop.f32.mrb[0].mxu0
      %v1331 = vadd.f32 %v1266, %v1330
      %v1332 = vpop.f32.mrb[0].mxu0
      %1333 = vmatprep.mubr.bf16.mxu0 %v493
      %1334 = vmatmul.mubr.bf16.gmra.mrb[0].mxu0 %v489
      %v1335 = vpop.f32.mrb[0].mxu0
      %v1336 = vadd.f32 %v1271, %v1335
      %v1337 = vpop.f32.mrb[0].mxu0
      %v1338 = vpop.f32.mrb[0].mxu0
      %v1339 = vadd.f32 %v1274, %v1338
      %v1340 = vpop.f32.mrb[0].mxu0
      %1341 = vdwg.mxu0
      %1342 = vmatprep.subr.bf16.mxu0 0
      %1343 = vmatpush1.bf16.msra.mxu0 %v1002
      %1344 = vmatprep.subr.bf16.mxu0 0
      %1345 = vmatpush1.bf16.msra.mxu0 %v1003
      %1346 = vmatprep.subr.bf16.mxu0 0
      %1347 = vmatpush1.bf16.msra.mxu0 %v1004
      %1348 = vmatprep.subr.bf16.mxu0 0
      %1349 = vmatpush1.bf16.msra.mxu0 %v1005
      %1350 = vmatprep.subr.bf16.mxu0 0
      %1351 = vmatpush1.bf16.msra.mxu0 %v1006
      %1352 = vmatprep.subr.bf16.mxu0 0
      %1353 = vmatpush1.bf16.msra.mxu0 %v1007
      %1354 = vmatprep.subr.bf16.mxu0 0
      %1355 = vmatpush1.bf16.msra.mxu0 %v1008
      %1356 = vmatprep.subr.bf16.mxu0 0
      %1357 = vmatpush1.bf16.msra.mxu0 %v1009
      %1358 = vmatprep.subr.bf16.mxu0 0
      %1359 = vmatpush1.bf16.msra.mxu0 0
      %1360 = vmatprep.subr.bf16.mxu0 0
      %1361 = vmatpush1.bf16.msra.mxu0 0
      %1362 = vmatprep.subr.bf16.mxu0 0
      %1363 = vmatpush1.bf16.msra.mxu0 0
      %1364 = vmatprep.subr.bf16.mxu0 0
      %1365 = vmatpush1.bf16.msra.mxu0 0
      %1366 = vmatprep.subr.bf16.mxu0 0
      %1367 = vmatpush1.bf16.msra.mxu0 0
      %1368 = vmatprep.subr.bf16.mxu0 0
      %1369 = vmatpush1.bf16.msra.mxu0 0
      %1370 = vmatprep.subr.bf16.mxu0 0
      %1371 = vmatpush1.bf16.msra.mxu0 0
      %1372 = vmatprep.subr.bf16.mxu0 0
      %1373 = vmatpush1.bf16.msra.mxu0 0
      %1374 = vmatprep.mubr.bf16.mxu0 0
      %1375 = vmatmul.mubr.bf16.gmra.mrb[0].mxu0 %v469
      %v1376 = vpop.f32.mrb[0].mxu0
      %v1377 = vadd.f32 %v1312, %v1376
      %v1378 = vpop.f32.mrb[0].mxu0
      %v1379 = vpop.f32.mrb[0].mxu0
      %v1380 = vadd.f32 %v1315, %v1379
      %v1381 = vpop.f32.mrb[0].mxu0
      %1382 = vmatprep.mubr.bf16.mxu0 0
      %1383 = vmatmul.mubr.bf16.gmra.mrb[0].mxu0 %v470
      %v1384 = vpop.f32.mrb[0].mxu0
      %v1385 = vadd.f32 %v1320, %v1384
      %v1386 = vpop.f32.mrb[0].mxu0
      %v1387 = vpop.f32.mrb[0].mxu0
      %v1388 = vadd.f32 %v1323, %v1387
      %v1389 = vpop.f32.mrb[0].mxu0
      %1390 = vmatprep.mubr.bf16.mxu0 0
      %1391 = vmatmul.mubr.bf16.gmra.mrb[0].mxu0 %v485
      %v1392 = vpop.f32.mrb[0].mxu0
      %v1393 = vadd.f32 %v1328, %v1392
      %v1394 = vpop.f32.mrb[0].mxu0
      %v1395 = vpop.f32.mrb[0].mxu0
      %v1396 = vadd.f32 %v1331, %v1395
      %v1397 = vpop.f32.mrb[0].mxu0
      %1398 = vmatprep.mubr.bf16.mxu0 0
      %1399 = vmatmul.mubr.bf16.gmra.mrb[0].mxu0 %v497
      %v1400 = vpop.f32.mrb[0].mxu0
      %v1401 = vadd.f32 %v1336, %v1400
      %v1402 = vpop.f32.mrb[0].mxu0
      %v1403 = vpop.f32.mrb[0].mxu0
      %v1404 = vadd.f32 %v1339, %v1403
      %v1405 = vpop.f32.mrb[0].mxu0
      %1406 = vdwg.mxu0
      %vm1407 = vcmp.ge.f32.partialorder %v1377, 0.0
      %vm1408 = vcmp.ge.f32.partialorder %v1380, 0.0
      %vm1409 = vcmp.ge.f32.partialorder %v1385, 0.0
      %vm1410 = vcmp.ge.f32.partialorder %v1388, 0.0
      %vm1411 = vcmp.ge.f32.partialorder %v1393, 0.0
      %vm1412 = vcmp.ge.f32.partialorder %v1396, 0.0
      %vm1413 = vcmp.ge.f32.partialorder %v1401, 0.0
      %vm1414 = vcmp.ge.f32.partialorder %v1404, 0.0
      %v1415 = vmul.f32 %v1377, 0.1
      %v1416 = vmul.f32 %v1380, 0.1
      %v1417 = vmul.f32 %v1385, 0.1
      %v1418 = vmul.f32 %v1388, 0.1
      %v1419 = vmul.f32 %v1393, 0.1
      %v1420 = vmul.f32 %v1396, 0.1
      %v1421 = vmul.f32 %v1401, 0.1
      %v1422 = vmul.f32 %v1404, 0.1
      %v1423 = vsel %vm1407, %v1377, %v1415
      %v1424 = vsel %vm1408, %v1380, %v1416
      %v1425 = vsel %vm1409, %v1385, %v1417
      %v1426 = vsel %vm1410, %v1388, %v1418
      %v1427 = vsel %vm1411, %v1393, %v1419
      %v1428 = vsel %vm1412, %v1396, %v1420
      %v1429 = vsel %vm1413, %v1401, %v1421
      %v1430 = vsel %vm1414, %v1404, %v1422
      %1431 = vst [vmem:[%s192] sm:$0xff] %v1423
      %1432 = vst [vmem:[%s192 + $0x8] sm:$0xff] %v1424
      %1433 = vst [vmem:[%s192 + $0x10] sm:$0xff] %v1425
      %1434 = vst [vmem:[%s192 + $0x18] sm:$0xff] %v1426
      %1435 = vst [vmem:[%s192 + $0x20] sm:$0xff] %v1427
      %1436 = vst [vmem:[%s192 + $0x28] sm:$0xff] %v1428
      %1437 = vst [vmem:[%s192 + $0x30] sm:$0xff] %v1429
      %1438 = vst [vmem:[%s192 + $0x38] sm:$0xff] %v1430
      %s1439 = smul.u32 8, %s19
      %p1440 = scmp.lt.s32.totalorder %s18, 1
      %s1441 = scalar_select %p1440, %s18, 1
      %p1442 = scmp.lt.s32.totalorder %s1439, 31
      %s1443 = scalar_select %p1442, %s1439, 31
      %s1444 = smul.addr %s1441, 32
      %s1445 = sadd.s32 %s1443, %s1444
      %s1446 = smul.addr %s1445, 8
      %s1447 = scalar_lea.vmem %s3, %s1446
      // Predicated region
      $region33: #{conv_block_apply.1} parent=31 // pred_check
        %p1448 = pneg %p114
      $region34: #{conv_block_apply.1} parent=31 // pred_check_branch
        %1450 = sbr.rel (%p1448) target = $region36
      $region35: #{conv_block_apply.1} parent=31 // pred_region
        %s1451 = smul.u32 8, %s19
      $region36: #{conv_block_apply.1} parent=31 // pred_fallthru
        _
    $region32: #{conv_block_apply.1} parent=5 // pred_fallthru
      _
    %p1452 = scmp.le.s32.totalorder 2, %s9
    // Predicated region
    $region37: #{conv_block_apply.1} parent=5 // pred_check
      %p1453 = pneg %p1452
    $region38: #{conv_block_apply.1} parent=5 // pred_check_branch
      %1455 = sbr.rel (%p1453) target = $region40
    $region39: #{conv_block_apply.1} parent=5 // pred_region
      %s1456 = ssub.s32 %s9, 2
      // Predicated region
      $region41: #{conv_block_apply.1} parent=39 // pred_check
        %p1457 = pneg %p120
      $region42: #{conv_block_apply.1} parent=39 // pred_check_branch
        %1459 = sbr.rel (%p1457) target = $region44
      $region43: #{conv_block_apply.1} parent=39 // pred_region
        %s1460 = smul.u32 8, %s21
        %p1461 = scmp.lt.s32.totalorder %s20, 1
        %s1462 = scalar_select %p1461, %s20, 1
        %p1463 = scmp.lt.s32.totalorder %s1460, 31
        %s1464 = scalar_select %p1463, %s1460, 31
        %s1465 = smul.addr %s1462, 32
        %s1466 = sadd.s32 %s1464, %s1465
        %s1467 = smul.addr %s1466, 8
        %s1468 = scalar_lea.vmem %s3, %s1467
      $region44: #{conv_block_apply.1} parent=39 // pred_fallthru
        _
    $region40: #{conv_block_apply.1} parent=5 // pred_fallthru
      _
  $region6: #{conv_block_apply.1} parent=0 // loop_footer
    %s13 = sadd.s32 1, %s9
  $region7: #{conv_block_apply.1} parent=0 // loop_footer_branch
    %8 = sbr.rel target = $region3
  $region8: #{conv_block_apply.1} parent=0 // loop_exit
    _

</llo_original>
